<compile_context>
chip_gen: v5e
topology: v5e:2x2
jax: 0.10.0
libtpu: 0.0.40
codegen_flags: <defaults>
</compile_context>

<pallas_src>
import jax
import jax.numpy as jnp
from jax.experimental import pallas as pl
from jax.experimental.pallas import tpu as pltpu

LANE = 128  # per-gate lane block width (one vreg lane span)


def rnn_lstm_kernel(x_ref, h_ref, w_ref, b_ref, out_ref, hid_ref):
    """Single-block kernel: all operands resident in VMEM.

    x_ref   : (B, I)           input1
    h_ref   : (B, 128)         hidden, lanes [0:H] valid, rest exactly 0
    w_ref   : (I+128, 4*128)   fused weight slab [ i | g | o | logits ]
    b_ref   : (1, 4*128)       fused bias row (padded logit lanes hold -1e30)
    out_ref : (B, 128)         log-softmax output, lanes [0:O] valid
    hid_ref : (B, 128)         new hidden slab,    lanes [0:H] valid, rest 0
    """
    I = x_ref.shape[1]

    # Fused gates+logits matmul; the concat is replaced by a sublane-aligned
    # row split of the slab (x-rows then hidden-rows), keeping N = 512 lane-dense
    # and the hidden operand K = 128 aligned on the MXU.
    z = (jnp.dot(x_ref[...], w_ref[:I, :], preferred_element_type=jnp.float32)
         + jnp.dot(h_ref[...], w_ref[I:, :], preferred_element_type=jnp.float32)
         + b_ref[...])

    # vreg-aligned 128-lane views (free; no ragged slicing).
    zi = z[:, 0 * LANE:1 * LANE]
    zg = z[:, 1 * LANE:2 * LANE]
    zo = z[:, 2 * LANE:3 * LANE]
    zl = z[:, 3 * LANE:4 * LANE]

    # ---- LSTMCell with zero internal state (hx = cx = 0) ----
    i_b = jax.nn.sigmoid(zi)          # padded lanes -> 0.5
    g_b = jnp.tanh(zg)                # padded lanes -> 0.0
    o_b = jax.nn.sigmoid(zo)          # padded lanes -> 0.5
    hid_ref[...] = o_b * jnp.tanh(i_b * g_b)   # padded lanes -> exactly 0

    # ---- i2o Linear + LogSoftmax(dim=1), full-width 128-lane reduction ----
    # Padded logit lanes carry -1e30 so they vanish in max / logsumexp.
    m = jnp.max(zl, axis=1, keepdims=True)
    shifted = zl - m
    lse = jnp.log(jnp.sum(jnp.exp(shifted), axis=1, keepdims=True))
    out_ref[...] = shifted - lse


def _vmem_spec():
    return pl.BlockSpec(memory_space=pltpu.MemorySpace.VMEM)


def prepare_fused_weights(params, input_size, hidden_size, output_size):
    """One-time weight prep (hoisted out of the recurrent loop).

    Builds an (I+128, 4*128) slab: lanes [0:128)=i-gate, [128:256)=g-gate,
    [256:384)=o-gate, [384:512)=i2o logits.  Rows [0:I) multiply input1, rows
    [I:I+H) multiply the (padded) hidden; rows [I+H:I+128) are zero so the
    padded hidden lanes contribute nothing.  Padded logit lanes get a -1e30
    bias so log_softmax ignores them.
    """
    I, H, O = input_size, hidden_size, output_size
    C = I + H
    assert H <= LANE and O <= LANE, "gate/output width must fit one 128-lane block"

    w_ih = params["w_ih"]                    # (4H, C)  PyTorch layout, gate order i,f,g,o
    bias = params["b_ih"] + params["b_hh"]   # (4H,)

    # Logical (C, 4*128) slab first, then embed hidden rows into the padded slab.
    Wc = jnp.zeros((C, 4 * LANE), jnp.float32)
    Wc = Wc.at[:, 0 * LANE:0 * LANE + H].set(w_ih[0 * H:1 * H, :].T)   # i
    Wc = Wc.at[:, 1 * LANE:1 * LANE + H].set(w_ih[2 * H:3 * H, :].T)   # g
    Wc = Wc.at[:, 2 * LANE:2 * LANE + H].set(w_ih[3 * H:4 * H, :].T)   # o
    Wc = Wc.at[:, 3 * LANE:3 * LANE + O].set(params["w_i2o"].T)        # logits

    W = jnp.zeros((I + LANE, 4 * LANE), jnp.float32)
    W = W.at[:I, :].set(Wc[:I, :])          # input rows
    W = W.at[I:I + H, :].set(Wc[I:, :])     # hidden rows; [I+H : I+128) stay zero

    b = jnp.zeros((1, 4 * LANE), jnp.float32)
    b = b.at[0, 0 * LANE:0 * LANE + H].set(bias[0 * H:1 * H])
    b = b.at[0, 1 * LANE:1 * LANE + H].set(bias[2 * H:3 * H])
    b = b.at[0, 2 * LANE:2 * LANE + H].set(bias[3 * H:4 * H])
    b = b.at[0, 3 * LANE:3 * LANE + O].set(params["b_i2o"])
    b = b.at[0, 3 * LANE + O:4 * LANE].set(-1e30)   # neutralize padded logit lanes
    return W, b


def rnn_lstm_step(input1, hidden_pad, w_fused, b_fused):
    """One recurrent step on lane-dense slabs: no wrapper-side pad/slice.

    hidden_pad : (B, 128) with lanes [H:128) == 0.
    Returns (out_pad (B,128), hidden_pad_new (B,128)); the new hidden slab can
    be fed straight back into the next step.
    """
    B = input1.shape[0]
    return pl.pallas_call(
        rnn_lstm_kernel,
        out_shape=(jax.ShapeDtypeStruct((B, LANE), jnp.float32),
                   jax.ShapeDtypeStruct((B, LANE), jnp.float32)),
        in_specs=[_vmem_spec(), _vmem_spec(), _vmem_spec(), _vmem_spec()],
        out_specs=(_vmem_spec(), _vmem_spec()),
    )(input1, hidden_pad, w_fused, b_fused)


def pad_hidden(hidden):
    B, H = hidden.shape
    return jnp.zeros((B, LANE), jnp.float32).at[:, :H].set(hidden)


def rnn_lstm_forward(input1, hidden, w_fused, b_fused, output_size):
    """Module-faithful single-step API: (B,I),(B,H) in -> (B,O),(B,H) out."""
    H = hidden.shape[1]
    out_pad, hid_pad = rnn_lstm_step(input1, pad_hidden(hidden), w_fused, b_fused)
    return out_pad[:, :output_size], hid_pad[:, :H]


def rnn_lstm_reference(input1, hidden, params):
    """Pure-JAX reference mirroring the PyTorch forward exactly."""
    combined = jnp.concatenate([input1, hidden], axis=1)
    H = hidden.shape[1]
    gates = combined @ params["w_ih"].T + params["b_ih"] + params["b_hh"]  # hx = 0
    i = jax.nn.sigmoid(gates[:, 0 * H:1 * H])
    f = jax.nn.sigmoid(gates[:, 1 * H:2 * H])
    g = jnp.tanh(gates[:, 2 * H:3 * H])
    o = jax.nn.sigmoid(gates[:, 3 * H:4 * H])
    c_new = f * 0.0 + i * g                    # cx = 0
    h_new = o * jnp.tanh(c_new)
    logits = combined @ params["w_i2o"].T + params["b_i2o"]
    output = jax.nn.log_softmax(logits, axis=1)
    return output, h_new


def init_params(key, input_size, hidden_size, output_size):
    """Deterministic init matching PyTorch parameter shapes (uniform +-1/sqrt(H))."""
    C = input_size + hidden_size
    k = 1.0 / jnp.sqrt(hidden_size)
    ks = jax.random.split(key, 6)
    params = {
        "w_ih": jax.random.uniform(ks[0], (4 * hidden_size, C), jnp.float32, -k, k),
        "w_hh": jax.random.uniform(ks[1], (4 * hidden_size, hidden_size), jnp.float32, -k, k),
        "b_ih": jax.random.uniform(ks[2], (4 * hidden_size,), jnp.float32, -k, k),
        "b_hh": jax.random.uniform(ks[3], (4 * hidden_size,), jnp.float32, -k, k),
        "w_i2o": jax.random.uniform(ks[4], (output_size, C), jnp.float32,
                                    -1.0 / jnp.sqrt(C), 1.0 / jnp.sqrt(C)),
        "b_i2o": jax.random.uniform(ks[5], (output_size,), jnp.float32,
                                    -1.0 / jnp.sqrt(C), 1.0 / jnp.sqrt(C)),
    }
    return params


if __name__ == "__main__":
    B, INPUT, HIDDEN, OUTPUT = 8, 16, 32, 10

    key = jax.random.PRNGKey(0)
    k_in, k_hid, k_par = jax.random.split(key, 3)
    input1 = jax.random.normal(k_in, (B, INPUT), jnp.float32)
    hidden = jax.random.normal(k_hid, (B, HIDDEN), jnp.float32)
    params = init_params(k_par, INPUT, HIDDEN, OUTPUT)

    # Weight prep done ONCE (hoisted out of the recurrent loop).
    w_fused, b_fused = prepare_fused_weights(params, INPUT, HIDDEN, OUTPUT)

    # --- single-step check against the pure-JAX reference ---
    fwd = jax.jit(rnn_lstm_forward, static_argnums=(4,))
    out, h_new = fwd(input1, hidden, w_fused, b_fused, OUTPUT)
    jax.block_until_ready((out, h_new))

    ref_out, ref_h = rnn_lstm_reference(input1, hidden, params)
    assert out.shape == (B, OUTPUT) and h_new.shape == (B, HIDDEN)
    assert jnp.allclose(out, ref_out, atol=1e-5, rtol=1e-5), "log-softmax output mismatch"
    assert jnp.allclose(h_new, ref_h, atol=1e-5, rtol=1e-5), "hidden state mismatch"

    # --- short recurrent rollout: hidden stays a lane-dense (B,128) slab the
    #     whole time, so the loop body is a single pallas_call per step with no
    #     per-step XLA pad/slice; unpad once at the end. ---
    step = jax.jit(rnn_lstm_step)
    h_pad = pad_hidden(hidden)
    h_ref = hidden
    for _ in range(3):
        out_pad, h_pad = step(input1, h_pad, w_fused, b_fused)
        out_r, h_ref = rnn_lstm_reference(input1, h_ref, params)
    jax.block_until_ready((out_pad, h_pad))
    out_k = out_pad[:, :OUTPUT]
    h_k = h_pad[:, :HIDDEN]
    assert jnp.allclose(out_k, out_r, atol=1e-5, rtol=1e-5), "rollout output mismatch"
    assert jnp.allclose(h_k, h_ref, atol=1e-5, rtol=1e-5), "rollout hidden mismatch"
    # padded hidden lanes must remain exactly zero across the recurrence
    assert jnp.all(h_pad[:, HIDDEN:] == 0.0), "padded hidden lanes drifted from zero"

    print("KERNEL_OK")
</pallas_src>

<mosaic_0001>
module attributes {stable_mosaic.version = 11 : i64} {
  func.func @rnn_lstm_kernel(%arg0: memref<8x16xf32, #tpu.memory_space<vmem>>, %arg1: memref<8x128xf32, #tpu.memory_space<vmem>>, %arg2: memref<144x512xf32, #tpu.memory_space<vmem>>, %arg3: memref<1x512xf32, #tpu.memory_space<vmem>>, %arg4: memref<8x128xf32, #tpu.memory_space<vmem>>, %arg5: memref<8x128xf32, #tpu.memory_space<vmem>>) attributes {dimension_semantics = [], scalar_prefetch = 0 : i64, scratch_operands = 0 : i64, tpu.core_type = #tpu.core_type<tc>} {
    %c0 = arith.constant 0 : index
    %c0_0 = arith.constant 0 : index
    %0 = vector.load %arg0[%c0, %c0_0] : memref<8x16xf32, #tpu.memory_space<vmem>>, vector<8x16xf32>
    %c0_1 = arith.constant 0 : index
    %c0_2 = arith.constant 0 : index
    %1 = vector.load %arg2[%c0_1, %c0_2] : memref<144x512xf32, #tpu.memory_space<vmem>>, vector<16x512xf32>
    %cst = arith.constant dense<0.000000e+00> : vector<8x512xf32>
    %2 = tpu.matmul %0, %1, %cst {dimension_numbers = #tpu.dot_dimension_numbers<[1], [0], [0], [1], [0, 0, 1, 1], [], []>} : vector<8x16xf32>, vector<16x512xf32>, vector<8x512xf32> -> vector<8x512xf32>
    %c0_3 = arith.constant 0 : index
    %c0_4 = arith.constant 0 : index
    %3 = vector.load %arg1[%c0_3, %c0_4] : memref<8x128xf32, #tpu.memory_space<vmem>>, vector<8x128xf32>
    %c16 = arith.constant 16 : index
    %c0_5 = arith.constant 0 : index
    %4 = vector.load %arg2[%c16, %c0_5] : memref<144x512xf32, #tpu.memory_space<vmem>>, vector<128x512xf32>
    %cst_6 = arith.constant dense<0.000000e+00> : vector<8x512xf32>
    %5 = tpu.matmul %3, %4, %cst_6 {dimension_numbers = #tpu.dot_dimension_numbers<[1], [0], [0], [1], [0, 0, 1, 1], [], []>} : vector<8x128xf32>, vector<128x512xf32>, vector<8x512xf32> -> vector<8x512xf32>
    %6 = arith.addf %2, %5 : vector<8x512xf32>
    %c0_7 = arith.constant 0 : index
    %c0_8 = arith.constant 0 : index
    %7 = vector.load %arg3[%c0_7, %c0_8] : memref<1x512xf32, #tpu.memory_space<vmem>>, vector<1x512xf32>
    %8 = vector.broadcast %7 : vector<1x512xf32> to vector<8x512xf32>
    %9 = arith.addf %6, %8 : vector<8x512xf32>
    %10 = vector.extract_strided_slice %9 {offsets = [0, 0], sizes = [8, 128], strides = [1, 1]} : vector<8x512xf32> to vector<8x128xf32>
    %11 = vector.extract_strided_slice %9 {offsets = [0, 128], sizes = [8, 128], strides = [1, 1]} : vector<8x512xf32> to vector<8x128xf32>
    %12 = vector.extract_strided_slice %9 {offsets = [0, 256], sizes = [8, 128], strides = [1, 1]} : vector<8x512xf32> to vector<8x128xf32>
    %13 = vector.extract_strided_slice %9 {offsets = [0, 384], sizes = [8, 128], strides = [1, 1]} : vector<8x512xf32> to vector<8x128xf32>
    %14 = arith.negf %10 : vector<8x128xf32>
    %15 = math.exp %14 : vector<8x128xf32>
    %cst_9 = arith.constant 1.000000e+00 : f32
    %16 = vector.broadcast %cst_9 : f32 to vector<8x128xf32>
    %17 = arith.addf %16, %15 : vector<8x128xf32>
    %18 = arith.divf %16, %17 : vector<8x128xf32>
    %19 = math.tanh %11 : vector<8x128xf32>
    %20 = arith.negf %12 : vector<8x128xf32>
    %21 = math.exp %20 : vector<8x128xf32>
    %cst_10 = arith.constant 1.000000e+00 : f32
    %22 = vector.broadcast %cst_10 : f32 to vector<8x128xf32>
    %23 = arith.addf %22, %21 : vector<8x128xf32>
    %24 = arith.divf %22, %23 : vector<8x128xf32>
    %25 = arith.mulf %18, %19 : vector<8x128xf32>
    %26 = math.tanh %25 : vector<8x128xf32>
    %27 = arith.mulf %24, %26 : vector<8x128xf32>
    %c0_11 = arith.constant 0 : index
    %c0_12 = arith.constant 0 : index
    %28 = vector.load %arg5[%c0_11, %c0_12] : memref<8x128xf32, #tpu.memory_space<vmem>>, vector<8x128xf32>
    tpu.vector_store %arg5[%c0_11, %c0_12], %27 {strides = array<i32>} : memref<8x128xf32, #tpu.memory_space<vmem>>, vector<8x128xf32>,
    %cst_13 = arith.constant dense<0xFF800000> : vector<8xf32>
    %29 = vector.multi_reduction <maximumf>, %13, %cst_13 [1] : vector<8x128xf32> to vector<8xf32>
    %30 = vector.shape_cast %29 : vector<8xf32> to vector<8x1xf32>
    %31 = vector.broadcast %30 : vector<8x1xf32> to vector<8x128xf32>
    %32 = arith.subf %13, %31 : vector<8x128xf32>
    %33 = math.exp %32 : vector<8x128xf32>
    %cst_14 = arith.constant dense<0.000000e+00> : vector<8xf32>
    %34 = vector.multi_reduction <add>, %33, %cst_14 [1] : vector<8x128xf32> to vector<8xf32>
    %35 = vector.shape_cast %34 : vector<8xf32> to vector<8x1xf32>
    %36 = math.log %35 : vector<8x1xf32>
    %37 = vector.broadcast %36 : vector<8x1xf32> to vector<8x128xf32>
    %38 = arith.subf %32, %37 : vector<8x128xf32>
    %c0_15 = arith.constant 0 : index
    %c0_16 = arith.constant 0 : index
    %39 = vector.load %arg4[%c0_15, %c0_16] : memref<8x128xf32, #tpu.memory_space<vmem>>, vector<8x128xf32>
    tpu.vector_store %arg4[%c0_15, %c0_16], %38 {strides = array<i32>} : memref<8x128xf32, #tpu.memory_space<vmem>>, vector<8x128xf32>,
    return
  }
}

</mosaic_0001>

<llo_original>
// kernel: rnn_lstm_forward.1
$region0: #{rnn_lstm_forward.1}
  #allocation0 [shape = 'u32[]', space=smem, size = 0x4, offset = 0x4, fixed_abs, tag = 'smem constant byte address 0x4 - core index']
  #allocation1 [shape = 'u32[72,128]{1,0:T(1,128)}', space=vmem, size = 0x9000, scoped, tag = 'internal scratch']
  %s0 = inlined_call_operand.vmem [shape: f32[8,16], index: 0, kind: input, shape index: {}]
  %s1 = inlined_call_operand.vmem [shape: f32[8,128], index: 1, kind: input, shape index: {}]
  %s2 = inlined_call_operand.hbm [shape: f32[144,512], index: 2, kind: input, shape index: {}]
  %s3 = inlined_call_operand.vmem [shape: f32[1,512], index: 3, kind: input, shape index: {}]
  %s4 = inlined_call_operand.hbm [shape: f32[8,128], index: 4, kind: output, shape index: {0}]
  %s5 = inlined_call_operand.hbm [shape: f32[8,128], index: 5, kind: output, shape index: {1}]
  %6 = xla_tuple %s4, %s5
  %s7 = sld [smem:[#allocation0]]
  $region38: #{rnn_lstm_forward.1} parent=0
    _
  %s9 = ssub.s32 1, %s7
  %s10 = scalar_select 0, %s9, %s7
  $region1: #{rnn_lstm_forward.1} parent=0
    #allocation2 [shape = 'u8[294912]{0}', space=vmem, size = 0x48000, scoped, tag = 'input window, operand 2, single buffered']
    #allocation3 [shape = 's32[1]{0}', space=sflag, size = 0x4, scoped, tag = 'scoped memory for rnn_lstm_forward.1']
    #allocation4 [shape = 's32[1]{0}', space=sflag, size = 0x4, scoped, tag = 'scoped memory for rnn_lstm_forward.1']
    #allocation5 [shape = 'u8[4096]{0}', space=vmem, size = 0x1000, scoped, tag = 'output window, operand 0, single buffered']
    #allocation6 [shape = 'u8[4096]{0}', space=vmem, size = 0x1000, scoped, tag = 'output window, operand 1, single buffered']
    #allocation7 [shape = 's32[1]{0}', space=sflag, size = 0x4, scoped, tag = 'scoped memory for rnn_lstm_forward.1']
    %11 = vsyncpa [#allocation3], 0
    %12 = vsyncpa [#allocation4], 0
    %13 = vsyncpa [#allocation7], 0
    // Predicated region
    $region2: #{rnn_lstm_forward.1} parent=1 // pred_check
      _
    $region3: #{rnn_lstm_forward.1} parent=1 // pred_check_branch
      %15 = sbr.rel (0) target = $region5
    $region4: #{rnn_lstm_forward.1} parent=1 // pred_region
      _
    $region5: #{rnn_lstm_forward.1} parent=1 // pred_fallthru
      _
    // Predicated region
    $region6: #{rnn_lstm_forward.1} parent=1 // pred_check
      _
    $region7: #{rnn_lstm_forward.1} parent=1 // pred_check_branch
      %17 = sbr.rel (0) target = $region9
    $region8: #{rnn_lstm_forward.1} parent=1 // pred_region
      _
    $region9: #{rnn_lstm_forward.1} parent=1 // pred_fallthru
      _
    // Predicated region
    $region10: #{rnn_lstm_forward.1} parent=1 // pred_check
      _
    $region11: #{rnn_lstm_forward.1} parent=1 // pred_check_branch
      %19 = sbr.rel (0) target = $region13
    $region12: #{rnn_lstm_forward.1} parent=1 // pred_region
      %21 = vsyncadd [#allocation3], 0
      %s22 = sshll.u32 %s2, 4
      %s23 = int_to_ptr.hbm [resolvable:$true] %s22
      %s24 = sshll.u32 [#allocation2], 4
      %s25 = int_to_ptr.vmem [resolvable:$true] %s24
      %30 = dma.hbm_to_vmem [thread:$0]  %s23, 9216, %s25, [#allocation3], 512, 512, 32
    $region13: #{rnn_lstm_forward.1} parent=1 // pred_fallthru
      _
    // Predicated region
    $region14: #{rnn_lstm_forward.1} parent=1 // pred_check
      _
    $region15: #{rnn_lstm_forward.1} parent=1 // pred_check_branch
      %32 = sbr.rel (0) target = $region17
    $region16: #{rnn_lstm_forward.1} parent=1 // pred_region
      _
    $region17: #{rnn_lstm_forward.1} parent=1 // pred_fallthru
      _
    // Predicated region
    $region18: #{rnn_lstm_forward.1} parent=1 // pred_check
      _
    $region19: #{rnn_lstm_forward.1} parent=1 // pred_check_branch
      %34 = sbr.rel (0) target = $region21
    $region20: #{rnn_lstm_forward.1} parent=1 // pred_region
      %36 = dma.done [#allocation3], 9216
    $region21: #{rnn_lstm_forward.1} parent=1 // pred_fallthru
      _
    %v37 = vld [vmem:[%s0] sm:$0xff]
    %v38 = vld [vmem:[#allocation2] sm:$0xff]
    %v39 = vld [vmem:[#allocation2 + $0x8] sm:$0xff]
    %v40 = vld [vmem:[#allocation2 + $0x10] sm:$0xff]
    %v41 = vld [vmem:[#allocation2 + $0x18] sm:$0xff]
    %v42 = vld [vmem:[#allocation2 + $0x20] sm:$0xff]
    %v43 = vld [vmem:[#allocation2 + $0x28] sm:$0xff]
    %v44 = vld [vmem:[#allocation2 + $0x30] sm:$0xff]
    %v45 = vld [vmem:[#allocation2 + $0x38] sm:$0xff]
    %v46 = vld [vmem:[%s1] sm:$0xff]
    %v47 = vld [vmem:[#allocation2 + $0x40] sm:$0xff]
    %v48 = vld [vmem:[#allocation2 + $0x48] sm:$0xff]
    %v49 = vld [vmem:[#allocation2 + $0x50] sm:$0xff]
    %v50 = vld [vmem:[#allocation2 + $0x58] sm:$0xff]
    %v51 = vld [vmem:[#allocation2 + $0x60] sm:$0xff]
    %v52 = vld [vmem:[#allocation2 + $0x68] sm:$0xff]
    %v53 = vld [vmem:[#allocation2 + $0x70] sm:$0xff]
    %v54 = vld [vmem:[#allocation2 + $0x78] sm:$0xff]
    %v55 = vld [vmem:[#allocation2 + $0x80] sm:$0xff]
    %v56 = vld [vmem:[#allocation2 + $0x88] sm:$0xff]
    %v57 = vld [vmem:[#allocation2 + $0x90] sm:$0xff]
    %v58 = vld [vmem:[#allocation2 + $0x98] sm:$0xff]
    %v59 = vld [vmem:[#allocation2 + $0xa0] sm:$0xff]
    %v60 = vld [vmem:[#allocation2 + $0xa8] sm:$0xff]
    %v61 = vld [vmem:[#allocation2 + $0xb0] sm:$0xff]
    %v62 = vld [vmem:[#allocation2 + $0xb8] sm:$0xff]
    %v63 = vld [vmem:[#allocation2 + $0xc0] sm:$0xff]
    %v64 = vld [vmem:[#allocation2 + $0xc8] sm:$0xff]
    %v65 = vld [vmem:[#allocation2 + $0xd0] sm:$0xff]
    %v66 = vld [vmem:[#allocation2 + $0xd8] sm:$0xff]
    %v67 = vld [vmem:[#allocation2 + $0xe0] sm:$0xff]
    %v68 = vld [vmem:[#allocation2 + $0xe8] sm:$0xff]
    %v69 = vld [vmem:[#allocation2 + $0xf0] sm:$0xff]
    %v70 = vld [vmem:[#allocation2 + $0xf8] sm:$0xff]
    %v71 = vld [vmem:[#allocation2 + $0x100] sm:$0xff]
    %v72 = vld [vmem:[#allocation2 + $0x108] sm:$0xff]
    %v73 = vld [vmem:[#allocation2 + $0x110] sm:$0xff]
    %v74 = vld [vmem:[#allocation2 + $0x118] sm:$0xff]
    %v75 = vld [vmem:[#allocation2 + $0x120] sm:$0xff]
    %v76 = vld [vmem:[#allocation2 + $0x128] sm:$0xff]
    %v77 = vld [vmem:[#allocation2 + $0x130] sm:$0xff]
    %v78 = vld [vmem:[#allocation2 + $0x138] sm:$0xff]
    %v79 = vld [vmem:[#allocation2 + $0x140] sm:$0xff]
    %v80 = vld [vmem:[#allocation2 + $0x148] sm:$0xff]
    %v81 = vld [vmem:[#allocation2 + $0x150] sm:$0xff]
    %v82 = vld [vmem:[#allocation2 + $0x158] sm:$0xff]
    %v83 = vld [vmem:[#allocation2 + $0x160] sm:$0xff]
    %v84 = vld [vmem:[#allocation2 + $0x168] sm:$0xff]
    %v85 = vld [vmem:[#allocation2 + $0x170] sm:$0xff]
    %v86 = vld [vmem:[#allocation2 + $0x178] sm:$0xff]
    %v87 = vld [vmem:[#allocation2 + $0x180] sm:$0xff]
    %v88 = vld [vmem:[#allocation2 + $0x188] sm:$0xff]
    %v89 = vld [vmem:[#allocation2 + $0x190] sm:$0xff]
    %v90 = vld [vmem:[#allocation2 + $0x198] sm:$0xff]
    %v91 = vld [vmem:[#allocation2 + $0x1a0] sm:$0xff]
    %v92 = vld [vmem:[#allocation2 + $0x1a8] sm:$0xff]
    %v93 = vld [vmem:[#allocation2 + $0x1b0] sm:$0xff]
    %v94 = vld [vmem:[#allocation2 + $0x1b8] sm:$0xff]
    %v95 = vld [vmem:[#allocation2 + $0x1c0] sm:$0xff]
    %v96 = vld [vmem:[#allocation2 + $0x1c8] sm:$0xff]
    %v97 = vld [vmem:[#allocation2 + $0x1d0] sm:$0xff]
    %v98 = vld [vmem:[#allocation2 + $0x1d8] sm:$0xff]
    %v99 = vld [vmem:[#allocation2 + $0x1e0] sm:$0xff]
    %v100 = vld [vmem:[#allocation2 + $0x1e8] sm:$0xff]
    %v101 = vld [vmem:[#allocation2 + $0x1f0] sm:$0xff]
    %v102 = vld [vmem:[#allocation2 + $0x1f8] sm:$0xff]
    %v103 = vld [vmem:[#allocation2 + $0x200] sm:$0xff]
    %v104 = vld [vmem:[#allocation2 + $0x208] sm:$0xff]
    %v105 = vld [vmem:[#allocation2 + $0x210] sm:$0xff]
    %v106 = vld [vmem:[#allocation2 + $0x218] sm:$0xff]
    %v107 = vld [vmem:[#allocation2 + $0x220] sm:$0xff]
    %v108 = vld [vmem:[#allocation2 + $0x228] sm:$0xff]
    %v109 = vld [vmem:[#allocation2 + $0x230] sm:$0xff]
    %v110 = vld [vmem:[#allocation2 + $0x238] sm:$0xff]
    %111 = vmatpush.msra.mxu0 %v107
    %112 = vmatpush.msra.mxu0 %v103
    %113 = vmatpush.msra.mxu0 %v99
    %114 = vmatpush.msra.mxu0 %v95
    %115 = vmatpush.msra.mxu0 %v91
    %116 = vmatpush.msra.mxu0 %v87
    %117 = vmatpush.msra.mxu0 %v83
    %118 = vmatpush.msra.mxu0 %v79
    %119 = vmatpush.msra.mxu0 %v75
    %120 = vmatpush.msra.mxu0 %v71
    %121 = vmatpush.msra.mxu0 %v67
    %122 = vmatpush.msra.mxu0 %v63
    %123 = vmatpush.msra.mxu0 %v59
    %124 = vmatpush.msra.mxu0 %v55
    %125 = vmatpush.msra.mxu0 %v51
    %126 = vmatpush.msra.mxu0 %v47
    %127 = vmatmul.f32.gmra.mxu0 %v46
    %v128 = vpop.f32.mrf.mxu0
    %v129 = vadd.f32 0.0, %v128
    %130 = vdwg.mxu0
    %131 = vmatpush.msra.mxu0 %v108
    %132 = vmatpush.msra.mxu0 %v104
    %133 = vmatpush.msra.mxu0 %v100
    %134 = vmatpush.msra.mxu0 %v96
    %135 = vmatpush.msra.mxu0 %v92
    %136 = vmatpush.msra.mxu0 %v88
    %137 = vmatpush.msra.mxu0 %v84
    %138 = vmatpush.msra.mxu0 %v80
    %139 = vmatpush.msra.mxu0 %v76
    %140 = vmatpush.msra.mxu0 %v72
    %141 = vmatpush.msra.mxu0 %v68
    %142 = vmatpush.msra.mxu0 %v64
    %143 = vmatpush.msra.mxu0 %v60
    %144 = vmatpush.msra.mxu0 %v56
    %145 = vmatpush.msra.mxu0 %v52
    %146 = vmatpush.msra.mxu0 %v48
    %147 = vmatmul.f32.gmra.mxu0 %v46
    %v148 = vpop.f32.mrf.mxu0
    %v149 = vadd.f32 0.0, %v148
    %150 = vdwg.mxu0
    %151 = vmatpush.msra.mxu0 %v109
    %152 = vmatpush.msra.mxu0 %v105
    %153 = vmatpush.msra.mxu0 %v101
    %154 = vmatpush.msra.mxu0 %v97
    %155 = vmatpush.msra.mxu0 %v93
    %156 = vmatpush.msra.mxu0 %v89
    %157 = vmatpush.msra.mxu0 %v85
    %158 = vmatpush.msra.mxu0 %v81
    %159 = vmatpush.msra.mxu0 %v77
    %160 = vmatpush.msra.mxu0 %v73
    %161 = vmatpush.msra.mxu0 %v69
    %162 = vmatpush.msra.mxu0 %v65
    %163 = vmatpush.msra.mxu0 %v61
    %164 = vmatpush.msra.mxu0 %v57
    %165 = vmatpush.msra.mxu0 %v53
    %166 = vmatpush.msra.mxu0 %v49
    %167 = vmatmul.f32.gmra.mxu0 %v46
    %v168 = vpop.f32.mrf.mxu0
    %v169 = vadd.f32 0.0, %v168
    %170 = vdwg.mxu0
    %171 = vmatpush.msra.mxu0 %v110
    %172 = vmatpush.msra.mxu0 %v106
    %173 = vmatpush.msra.mxu0 %v102
    %174 = vmatpush.msra.mxu0 %v98
    %175 = vmatpush.msra.mxu0 %v94
    %176 = vmatpush.msra.mxu0 %v90
    %177 = vmatpush.msra.mxu0 %v86
    %178 = vmatpush.msra.mxu0 %v82
    %179 = vmatpush.msra.mxu0 %v78
    %180 = vmatpush.msra.mxu0 %v74
    %181 = vmatpush.msra.mxu0 %v70
    %182 = vmatpush.msra.mxu0 %v66
    %183 = vmatpush.msra.mxu0 %v62
    %184 = vmatpush.msra.mxu0 %v58
    %185 = vmatpush.msra.mxu0 %v54
    %186 = vmatpush.msra.mxu0 %v50
    %187 = vmatmul.f32.gmra.mxu0 %v46
    %v188 = vpop.f32.mrf.mxu0
    %v189 = vadd.f32 0.0, %v188
    %190 = vdwg.mxu0
    %vm191 = vcmask 130048
    %v193 = vsel %vm191, %v37, 0
    %195 = vmatpush.msra.mxu0 0.0
    %196 = vmatpush.msra.mxu0 0.0
    %197 = vmatpush.msra.mxu0 0.0
    %198 = vmatpush.msra.mxu0 0.0
    %199 = vmatpush.msra.mxu0 0.0
    %200 = vmatpush.msra.mxu0 0.0
    %201 = vmatpush.msra.mxu0 0.0
    %202 = vmatpush.msra.mxu0 0.0
    %203 = vmatpush.msra.mxu0 0.0
    %204 = vmatpush.msra.mxu0 0.0
    %205 = vmatpush.msra.mxu0 0.0
    %206 = vmatpush.msra.mxu0 0.0
    %207 = vmatpush.msra.mxu0 0.0
    %208 = vmatpush.msra.mxu0 0.0
    %209 = vmatpush.msra.mxu0 %v42
    %210 = vmatpush.msra.mxu0 %v38
    %211 = vmatmul.f32.gmra.mxu0 %v193
    %v212 = vpop.f32.mrf.mxu0
    %v213 = vadd.f32 %v129, %v212
    %214 = vdwg.mxu0
    %215 = vmatpush.msra.mxu0 0.0
    %216 = vmatpush.msra.mxu0 0.0
    %217 = vmatpush.msra.mxu0 0.0
    %218 = vmatpush.msra.mxu0 0.0
    %219 = vmatpush.msra.mxu0 0.0
    %220 = vmatpush.msra.mxu0 0.0
    %221 = vmatpush.msra.mxu0 0.0
    %222 = vmatpush.msra.mxu0 0.0
    %223 = vmatpush.msra.mxu0 0.0
    %224 = vmatpush.msra.mxu0 0.0
    %225 = vmatpush.msra.mxu0 0.0
    %226 = vmatpush.msra.mxu0 0.0
    %227 = vmatpush.msra.mxu0 0.0
    %228 = vmatpush.msra.mxu0 0.0
    %229 = vmatpush.msra.mxu0 %v43
    %230 = vmatpush.msra.mxu0 %v39
    %231 = vmatmul.f32.gmra.mxu0 %v193
    %v232 = vpop.f32.mrf.mxu0
    %v233 = vadd.f32 %v149, %v232
    %234 = vdwg.mxu0
    %235 = vmatpush.msra.mxu0 0.0
    %236 = vmatpush.msra.mxu0 0.0
    %237 = vmatpush.msra.mxu0 0.0
    %238 = vmatpush.msra.mxu0 0.0
    %239 = vmatpush.msra.mxu0 0.0
    %240 = vmatpush.msra.mxu0 0.0
    %241 = vmatpush.msra.mxu0 0.0
    %242 = vmatpush.msra.mxu0 0.0
    %243 = vmatpush.msra.mxu0 0.0
    %244 = vmatpush.msra.mxu0 0.0
    %245 = vmatpush.msra.mxu0 0.0
    %246 = vmatpush.msra.mxu0 0.0
    %247 = vmatpush.msra.mxu0 0.0
    %248 = vmatpush.msra.mxu0 0.0
    %249 = vmatpush.msra.mxu0 %v44
    %250 = vmatpush.msra.mxu0 %v40
    %251 = vmatmul.f32.gmra.mxu0 %v193
    %v252 = vpop.f32.mrf.mxu0
    %v253 = vadd.f32 %v169, %v252
    %254 = vdwg.mxu0
    %255 = vmatpush.msra.mxu0 0.0
    %256 = vmatpush.msra.mxu0 0.0
    %257 = vmatpush.msra.mxu0 0.0
    %258 = vmatpush.msra.mxu0 0.0
    %259 = vmatpush.msra.mxu0 0.0
    %260 = vmatpush.msra.mxu0 0.0
    %261 = vmatpush.msra.mxu0 0.0
    %262 = vmatpush.msra.mxu0 0.0
    %263 = vmatpush.msra.mxu0 0.0
    %264 = vmatpush.msra.mxu0 0.0
    %265 = vmatpush.msra.mxu0 0.0
    %266 = vmatpush.msra.mxu0 0.0
    %267 = vmatpush.msra.mxu0 0.0
    %268 = vmatpush.msra.mxu0 0.0
    %269 = vmatpush.msra.mxu0 %v45
    %270 = vmatpush.msra.mxu0 %v41
    %271 = vmatmul.f32.gmra.mxu0 %v193
    %v272 = vpop.f32.mrf.mxu0
    %v273 = vadd.f32 %v189, %v272
    %274 = vdwg.mxu0
    %v275 = vld [vmem:[%s3] sm:$0xf]
    %v277 = vperm.slane %v275, 0
    %v278 = vperm.slane %v275, 1
    %v279 = vperm.slane %v275, 2
    %v280 = vperm.slane %v275, 3
    %v285 = vadd.f32 %v213, %v277
    %v286 = vadd.f32 %v233, %v278
    %v287 = vadd.f32 %v253, %v279
    %v288 = vadd.f32 %v273, %v280
    %v289 = vxor.u32 %v285, 2147483648
    %v290 = vmul.f32 %v289, 1.442695
    %v291 = vpow.pop %v290
    %v292 = vadd.f32 %v291, 1.0
    %v293 = vrcp.pop %v292
    %v294 = vmul.f32 %v292, %v293
    %v295 = vsub.f32 1.0, %v294
    %v296 = vmul.f32 %v293, %v295
    %v297 = vadd.f32 %v293, %v296
    %vm298 = vweird.f32 %v292
    %vm299 = vweird.f32 %v293
    %vm300 = vmor %vm298, %vm299
    %v301 = vsel %vm300, %v293, %v297
    %v302 = vand.u32 2147483647, %v292
    %vm303 = vcmp.eq.f32.partialorder %v302, 8.507059e+37
    %v304 = vand.u32 %v292, 2147483648
    %v305 = vor.u32 1.1754944e-38, %v304
    %v306 = vsel %vm303, %v305, %v301
    %v307 = vmul.f32 1.0, %v306
    %v308 = vtanh.pop %v286
    %v309 = vxor.u32 %v287, 2147483648
    %v310 = vmul.f32 %v309, 1.442695
    %v311 = vpow.pop %v310
    %v312 = vadd.f32 %v311, 1.0
    %v313 = vrcp.pop %v312
    %v314 = vmul.f32 %v312, %v313
    %v315 = vsub.f32 1.0, %v314
    %v316 = vmul.f32 %v313, %v315
    %v317 = vadd.f32 %v313, %v316
    %vm318 = vweird.f32 %v312
    %vm319 = vweird.f32 %v313
    %vm320 = vmor %vm318, %vm319
    %v321 = vsel %vm320, %v313, %v317
    %v322 = vand.u32 2147483647, %v312
    %vm323 = vcmp.eq.f32.partialorder %v322, 8.507059e+37
    %v324 = vand.u32 %v312, 2147483648
    %v325 = vor.u32 1.1754944e-38, %v324
    %v326 = vsel %vm323, %v325, %v321
    %v327 = vmul.f32 1.0, %v326
    %v328 = vmul.f32 %v307, %v308
    %v329 = vtanh.pop %v328
    %v330 = vmul.f32 %v327, %v329
    %331 = vst [vmem:[#allocation6] sm:$0xff] %v330
    %332 = vmax.xlane.f32.xlu0 %v288
    %v333 = vpop.xlane.xlu0 %332
    %v334 = vsub.f32 %v288, %v333
    %v335 = vmul.f32 %v334, 1.442695
    %v336 = vpow.pop %v335
    %337 = vadd.xlane.f32.xlu0 %v336
    %v338 = vpop.xlane.xlu0 %337
    %v339 = vlog2.pop %v338
    %v340 = vmul.f32 %v339, 0.6931472
    %v341 = vsub.f32 %v334, %v340
    %342 = vst [vmem:[#allocation5] sm:$0xff] %v341
    // Predicated region
    $region22: #{rnn_lstm_forward.1} parent=1 // pred_check
      _
    $region23: #{rnn_lstm_forward.1} parent=1 // pred_check_branch
      %344 = sbr.rel (0) target = $region25
    $region24: #{rnn_lstm_forward.1} parent=1 // pred_region
      %346 = vsyncadd [#allocation4], 0
      %s348 = sshll.u32 [#allocation5], 4
      %s349 = int_to_ptr.vmem [resolvable:$true] %s348
      %s350 = sshll.u32 %s4, 4
      %s351 = int_to_ptr.hbm [resolvable:$true] %s350
      %353 = dma.vmem_to_hbm [thread:$0]  %s349, 128, %s351, [#allocation4]
    $region25: #{rnn_lstm_forward.1} parent=1 // pred_fallthru
      _
    // Predicated region
    $region26: #{rnn_lstm_forward.1} parent=1 // pred_check
      _
    $region27: #{rnn_lstm_forward.1} parent=1 // pred_check_branch
      %355 = sbr.rel (0) target = $region29
    $region28: #{rnn_lstm_forward.1} parent=1 // pred_region
      %357 = vsyncadd [#allocation7], 0
      %s359 = sshll.u32 [#allocation6], 4
      %s360 = int_to_ptr.vmem [resolvable:$true] %s359
      %s361 = sshll.u32 %s5, 4
      %s362 = int_to_ptr.hbm [resolvable:$true] %s361
      %364 = dma.vmem_to_hbm [thread:$0]  %s360, 128, %s362, [#allocation7]
    $region29: #{rnn_lstm_forward.1} parent=1 // pred_fallthru
      _
    // Predicated region
    $region30: #{rnn_lstm_forward.1} parent=1 // pred_check
      _
    $region31: #{rnn_lstm_forward.1} parent=1 // pred_check_branch
      %366 = sbr.rel (0) target = $region33
    $region32: #{rnn_lstm_forward.1} parent=1 // pred_region
      %368 = dma.done [#allocation4], 128
    $region33: #{rnn_lstm_forward.1} parent=1 // pred_fallthru
      _
    // Predicated region
    $region34: #{rnn_lstm_forward.1} parent=1 // pred_check
      _
    $region35: #{rnn_lstm_forward.1} parent=1 // pred_check_branch
      %370 = sbr.rel (0) target = $region37
    $region36: #{rnn_lstm_forward.1} parent=1 // pred_region
      %372 = dma.done [#allocation7], 128
    $region37: #{rnn_lstm_forward.1} parent=1 // pred_fallthru
      _
    %373 = vsyncpa [#allocation3], 1
    %374 = vsyncpa [#allocation4], 1
    %375 = vsyncpa [#allocation7], 1

</llo_original>
